<compile_context>
chip_gen: v7x
topology: tpu7x:2x2x1
jax: 0.10.0
libtpu: 0.0.40
codegen_flags: <defaults>
</compile_context>

<pallas_src>
import functools

import jax
import jax.numpy as jnp
import numpy as np
from jax import lax
from jax.experimental import pallas as pl
from jax.experimental.pallas import tpu as pltpu


# ----------------------------------------------------------------------------
# Small helpers
# ----------------------------------------------------------------------------
def _round_up(v, m):
    return ((v + m - 1) // m) * m


def _pad2(a, rows, cols):
    pr, pc = rows - a.shape[0], cols - a.shape[1]
    if pr or pc:
        a = jnp.pad(a, ((0, pr), (0, pc)))
    return a


def _tpu_generation_flags():
    """(has_bf16_vpu, multi_tensorcore) from the device kind, conservatively."""
    try:
        kind = jax.devices()[0].device_kind.lower()
    except Exception:  # pragma: no cover
        kind = ""
    older = any(t in kind for t in ("v2", "v3", "v4", "v5"))  # incl. v5e/v5p
    has_bf16_vpu = bool(kind) and not older                    # v6e / v7x
    multi_tc = "v7" in kind                                    # 2 TCs per chip
    return has_bf16_vpu, multi_tc


def _default_target_rows(hid_p, dw_itemsize):
    """Activation rows per grid step sized to the hidden width.

    ~6 live (rows, hid) intermediates in the depthwise section plus the
    double-buffered x/out blocks must stay well under the requested 48 MiB
    scoped VMEM (and v7x's 64 MiB physical VMEM).
    """
    budget = 24 * 1024 * 1024
    rows = budget // max(1, 6 * hid_p * dw_itemsize)
    return int(max(64, min(1024, (rows // 8) * 8)))


def _pick_block_batch(n, l_in, l_out, target_rows, multi_tc):
    """Samples per grid step: fill the MXU M dimension, keep row blocks
    sublane-aligned, and only split for >=2 grid steps on multi-TC chips."""
    valid = [b for b in range(1, n + 1)
             if n % b == 0
             and (b == n or (b * l_in) % 8 == 0)
             and (b == n or (b * l_out) % 8 == 0)]
    fit = [b for b in valid if b * l_in <= target_rows]
    b = max(fit) if fit else min(valid)
    if multi_tc and n // b < 2:          # only dual-TC parts benefit from a split
        alt = [c for c in valid if n // c >= 2]
        if alt:
            b = max(alt)
    return b


# ----------------------------------------------------------------------------
# Pallas kernel
# ----------------------------------------------------------------------------
def _inverted_residual_kernel(*refs, stride, l_in, use_res, has_expand,
                              matmul_dtype, dw_dtype):
    """Per grid step (B samples of length l_in, channels on lanes):

    x : (B*l_in, Cin_p)        activations
    w1: (Cin_p, H_p)           expand 1x1 weight, BN scale folded (matmul dtype)
    b1: (1, H_p)      f32      expand BN bias
    wd: (3, H_p)      dw dtype depthwise k=3 weight, BN scale folded
    b2: (1, H_p)      dw dtype depthwise BN bias
    w2: (H_p, Cout_p)          project 1x1 weight, BN scale folded (matmul dtype)
    b3: (1, Cout_p)   f32      project BN bias
    o : (B*l_out, Cout_p)
    """
    if has_expand:
        x_ref, w1_ref, b1_ref, wd_ref, b2_ref, w2_ref, b3_ref, o_ref = refs
    else:
        x_ref, wd_ref, b2_ref, w2_ref, b3_ref, o_ref = refs

    m_in = x_ref.shape[0]
    x = x_ref[...]

    # ---- expand: 1x1 conv + BN + ReLU6 (MXU) --------------------------------
    if has_expand:
        h = jnp.dot(x.astype(matmul_dtype), w1_ref[...],
                    preferred_element_type=jnp.float32)
        h = jnp.clip(h + b1_ref[...], 0.0, 6.0)           # f32
    else:
        h = x.astype(jnp.float32)
    hd = h.astype(dw_dtype)                               # VPU tap-math dtype
    hid = hd.shape[1]

    # ---- depthwise k=3, pad=1 conv + BN + ReLU6 (XLU rolls + VPU) ----------
    # Rows hold B samples of l_in contiguous positions; per-sample zero
    # padding becomes a boundary mask on the rolled taps.  The mask is built
    # from a single-column iota and broadcast across lanes in the selects.
    pos = lax.broadcasted_iota(jnp.int32, (m_in, 1), 0) % l_in
    zero = jnp.zeros((), dw_dtype)
    h_lo = pltpu.roll(h, 1, 0).astype(dw_dtype)           # row r <- h[r-1]
    h_lo = jnp.where(pos == 0, zero, h_lo)
    h_hi = pltpu.roll(h, m_in - 1, 0).astype(dw_dtype)    # row r <- h[r+1]
    h_hi = jnp.where(pos == l_in - 1, zero, h_hi)
    acc = h_lo * wd_ref[0:1, :] + hd * wd_ref[1:2, :] + h_hi * wd_ref[2:3, :]

    if stride > 1:
        # Downsample BEFORE bias/ReLU6 (commutes with row selection) to halve
        # the remaining elementwise work on the hidden-width tile.
        # TODO(synk): check via pl.lower_as_mlir that this does not
        # materialize a relayout copy; if it does, stage acc through a VMEM
        # scratch and read back with ref[pl.ds(0, m_out, stride=stride), :].
        acc = acc.reshape(m_in // stride, stride, hid)[:, 0, :]
    acc = jnp.clip(acc + b2_ref[...], 0.0, 6.0)

    # ---- project: 1x1 conv + BN (MXU, no activation) -----------------------
    y = jnp.dot(acc.astype(matmul_dtype), w2_ref[...],
                preferred_element_type=jnp.float32)
    y = y + b3_ref[...]
    if use_res:
        y = y + x.astype(jnp.float32)     # stride==1, Cin_p==Cout_p

    o_ref[...] = y.astype(o_ref.dtype)


# ----------------------------------------------------------------------------
# Wrappers
# ----------------------------------------------------------------------------
def inverted_residual_pallas_nlc(x_nlc, params, *, stride, use_res, has_expand,
                                 matmul_dtype=jnp.bfloat16, block_batch=None,
                                 pad_lanes=True, target_rows=None):
    """Channels-last entry point: x_nlc is (N, L, Cin) -> (N, L_out, Cout)."""
    w1, s1, b1, wd, s2, b2, w2, s3, b3 = params
    n, l_in, cin = x_nlc.shape
    hid = wd.shape[1]
    cout = w2.shape[1]
    out_dtype = x_nlc.dtype

    if use_res and (stride != 1 or cin != cout):
        raise ValueError("use_res requires stride == 1 and in_ch == out_ch "
                         f"(got stride={stride}, cin={cin}, cout={cout})")
    if stride > 1 and l_in % stride != 0:
        raise ValueError("stride > 1 requires L to be a multiple of stride")
    l_out = (l_in - 1) // stride + 1

    has_bf16_vpu, multi_tc = _tpu_generation_flags()
    is_bf16_mm = np.dtype(matmul_dtype) == np.dtype(jnp.bfloat16)
    dw_dtype = jnp.bfloat16 if (is_bf16_mm and has_bf16_vpu) else jnp.float32

    # ---- lane padding (zero-pad folded weights/biases; slice output) -------
    pad_out = pad_lanes and (cout % 128 != 0)
    cout_p = _round_up(cout, 128) if pad_out else cout
    pad_in = pad_out and use_res                 # residual: x lanes == y lanes
    cin_p = cout_p if pad_in else cin
    if has_expand:
        hid_p = _round_up(hid, 128) if pad_lanes else hid
    else:
        hid_p = cin_p                            # hidden == Cin when ratio == 1

    # Fold BN scales into the conv weights at trace time, pad, and cast the
    # MXU weights to the matmul dtype / the depthwise path to its VPU dtype.
    if has_expand:
        w1f = _pad2((w1 * s1).astype(matmul_dtype), cin_p, hid_p)
        b1f = _pad2(b1.astype(jnp.float32), 1, hid_p)
    wdf = _pad2((wd * s2).astype(dw_dtype), 3, hid_p)
    b2f = _pad2(b2.astype(dw_dtype), 1, hid_p)
    w2f = _pad2((w2 * s3).astype(matmul_dtype), hid_p, cout_p)
    b3f = _pad2(b3.astype(jnp.float32), 1, cout_p)

    x_in = x_nlc
    if cin_p != cin:
        x_in = jnp.pad(x_in, ((0, 0), (0, 0), (0, cin_p - cin)))
    if is_bf16_mm and not use_res:
        # Halve the x HBM->VMEM bytes; residual path keeps x in f32.
        x_in = x_in.astype(jnp.bfloat16)
    x_rows = x_in.reshape(n * l_in, cin_p)       # contiguous, free reshape

    if target_rows is None:
        target_rows = _default_target_rows(hid_p, np.dtype(dw_dtype).itemsize)
    bb = block_batch if block_batch is not None else _pick_block_batch(
        n, l_in, l_out, target_rows, multi_tc)
    assert n % bb == 0
    grid = (n // bb,)

    kernel = functools.partial(
        _inverted_residual_kernel, stride=stride, l_in=l_in, use_res=use_res,
        has_expand=has_expand, matmul_dtype=matmul_dtype, dw_dtype=dw_dtype)

    def _whole(arr):                             # grid-invariant, VMEM-resident
        return pl.BlockSpec(arr.shape, lambda i: (0, 0))

    in_arrays = [x_rows]
    in_specs = [pl.BlockSpec((bb * l_in, cin_p), lambda i: (i, 0))]
    if has_expand:
        in_arrays += [w1f, b1f]
        in_specs += [_whole(w1f), _whole(b1f)]
    in_arrays += [wdf, b2f, w2f, b3f]
    in_specs += [_whole(wdf), _whole(b2f), _whole(w2f), _whole(b3f)]

    out_rows = pl.pallas_call(
        kernel,
        out_shape=jax.ShapeDtypeStruct((n * l_out, cout_p), out_dtype),
        grid=grid,
        in_specs=in_specs,
        out_specs=pl.BlockSpec((bb * l_out, cout_p), lambda i: (i, 0)),
        compiler_params=pltpu.CompilerParams(
            dimension_semantics=("parallel",),
            # Above the 16 MiB (v5e) / 32 MiB (v6e, v7x) scoped defaults but
            # below v7x's 64 MiB physical VMEM.
            vmem_limit_bytes=48 * 1024 * 1024),
    )(*in_arrays)

    out = out_rows.reshape(n, l_out, cout_p)
    if cout_p != cout:
        out = out[:, :, :cout]
    return out


def inverted_residual_pallas(x_ncl, params, *, stride, use_res, has_expand,
                             matmul_dtype=jnp.bfloat16, block_batch=None):
    """PyTorch-layout adapter: x_ncl is (N, C_in, L) -> (N, C_out, L_out)."""
    x_nlc = jnp.transpose(x_ncl, (0, 2, 1))
    out_nlc = inverted_residual_pallas_nlc(
        x_nlc, params, stride=stride, use_res=use_res, has_expand=has_expand,
        matmul_dtype=matmul_dtype, block_batch=block_batch)
    return jnp.transpose(out_nlc, (0, 2, 1))


# ----------------------------------------------------------------------------
# Pure-JAX reference (NCW, lax.conv, HIGHEST precision) — PyTorch semantics.
# ----------------------------------------------------------------------------
def inverted_residual_ref(x_ncl, params, *, stride, use_res, has_expand):
    w1, s1, b1, wd, s2, b2, w2, s3, b3 = params
    prec = lax.Precision.HIGHEST
    h = x_ncl
    if has_expand:
        h = lax.conv_general_dilated(h, jnp.transpose(w1)[:, :, None], (1,),
                                     [(0, 0)],
                                     dimension_numbers=('NCH', 'OIH', 'NCH'),
                                     precision=prec)
        h = h * s1[0][None, :, None] + b1[0][None, :, None]
        h = jnp.clip(h, 0.0, 6.0)
    hidden = h.shape[1]
    wdep = jnp.transpose(wd)[:, None, :]            # (H, 1, 3)
    h = lax.conv_general_dilated(h, wdep, (stride,), [(1, 1)],
                                 dimension_numbers=('NCH', 'OIH', 'NCH'),
                                 feature_group_count=hidden, precision=prec)
    h = h * s2[0][None, :, None] + b2[0][None, :, None]
    h = jnp.clip(h, 0.0, 6.0)
    y = lax.conv_general_dilated(h, jnp.transpose(w2)[:, :, None], (1,),
                                 [(0, 0)],
                                 dimension_numbers=('NCH', 'OIH', 'NCH'),
                                 precision=prec)
    y = y * s3[0][None, :, None] + b3[0][None, :, None]
    if use_res:
        y = y + x_ncl
    return y


# ----------------------------------------------------------------------------
# Deterministic parameter construction (inference-mode BN folded to scale/bias).
# ----------------------------------------------------------------------------
def make_params(key, in_ch, out_ch, expand_ratio, eps=1e-5):
    hidden = int(round(in_ch * expand_ratio))
    keys = jax.random.split(key, 12)

    def bn_fold(kg, kb, km, kv, c):
        gamma = jax.random.uniform(kg, (c,), jnp.float32, 0.5, 1.5)
        beta = jax.random.normal(kb, (c,)) * 0.1
        mean = jax.random.normal(km, (c,)) * 0.1
        var = jax.random.uniform(kv, (c,), jnp.float32, 0.5, 1.5)
        scale = gamma / jnp.sqrt(var + eps)
        bias = beta - mean * scale
        return scale[None, :], bias[None, :]        # (1, C)

    # expand pointwise: torch weight (hidden, in, 1) -> stored as (in, hidden)
    w1 = jax.random.normal(keys[0], (in_ch, hidden)) * 0.1
    s1, b1 = bn_fold(keys[1], keys[2], keys[3], keys[4], hidden)
    # depthwise: torch weight (hidden, 1, 3) -> stored as (3, hidden)
    wd = jax.random.normal(keys[5], (3, hidden)) * 0.1
    s2, b2 = bn_fold(keys[6], keys[7], keys[8], keys[9], hidden)
    # project pointwise: torch weight (out, hidden, 1) -> stored as (hidden, out)
    w2 = jax.random.normal(keys[10], (hidden, out_ch)) * 0.1
    s3, b3 = bn_fold(keys[11], keys[0], keys[5], keys[10], out_ch)
    return (w1.astype(jnp.float32), s1, b1,
            wd.astype(jnp.float32), s2, b2,
            w2.astype(jnp.float32), s3, b3)


if __name__ == "__main__":
    key = jax.random.PRNGKey(0)
    k_x, k_p = jax.random.split(key)

    # Small shapes consistent with the module: batch=2, in=out=32 channels,
    # L=32, stride=1, expand_ratio=4 (hidden=128).
    N, in_ch, out_ch, L = 2, 32, 32, 32
    stride, expand_ratio = 1, 4
    use_res = (stride == 1 and in_ch == out_ch)
    has_expand = (expand_ratio != 1)

    x = jax.random.normal(k_x, (N, in_ch, L), jnp.float32)   # PyTorch NCW
    params = make_params(k_p, in_ch, out_ch, expand_ratio)

    ref = inverted_residual_ref(x, params, stride=stride, use_res=use_res,
                                has_expand=has_expand)

    # 1) Exact-structure check: f32 everywhere, tight tolerance.
    out_f32 = inverted_residual_pallas(x, params, stride=stride,
                                       use_res=use_res, has_expand=has_expand,
                                       matmul_dtype=jnp.float32)
    out_f32 = jax.block_until_ready(out_f32)
    assert out_f32.shape == ref.shape, (out_f32.shape, ref.shape)
    assert np.allclose(np.asarray(out_f32), np.asarray(ref),
                       atol=1e-4, rtol=1e-4), "f32 Pallas output mismatch"

    # 2) Default fast path: bf16 MXU operands (f32 accumulation), depthwise
    #    tap math in bf16 on bf16-VPU chips (v6e/v7x), f32 on v5e.  The bf16
    #    path intentionally deviates from the f32 reference within tolerance.
    out_bf16 = inverted_residual_pallas(x, params, stride=stride,
                                        use_res=use_res, has_expand=has_expand)
    out_bf16 = jax.block_until_ready(out_bf16)
    assert out_bf16.shape == ref.shape, (out_bf16.shape, ref.shape)
    assert np.allclose(np.asarray(out_bf16), np.asarray(ref),
                       atol=5e-2, rtol=5e-2), "bf16 Pallas output mismatch"

    print("KERNEL_OK")
</pallas_src>

<mosaic_0001>
module attributes {stable_mosaic.version = 11 : i64} {
  func.func @_inverted_residual_kernel(%arg0: i32, %arg1: memref<64x128xf32, #tpu.memory_space<vmem>>, %arg2: memref<128x128xf32, #tpu.memory_space<vmem>>, %arg3: memref<1x128xf32, #tpu.memory_space<vmem>>, %arg4: memref<3x128xf32, #tpu.memory_space<vmem>>, %arg5: memref<1x128xf32, #tpu.memory_space<vmem>>, %arg6: memref<128x128xf32, #tpu.memory_space<vmem>>, %arg7: memref<1x128xf32, #tpu.memory_space<vmem>>, %arg8: memref<64x128xf32, #tpu.memory_space<vmem>>) attributes {dimension_semantics = [#tpu.dimension_semantics<parallel>], iteration_bounds = array<i64: 1>, scalar_prefetch = 0 : i64, scratch_operands = 0 : i64, tpu.core_type = #tpu.core_type<tc>, window_params = [{transform_indices = @transform_0, window_bounds = array<i64: 64, 128>}, {pipeline_mode = #tpu.pipeline_mode<synchronous>, transform_indices = @transform_1, window_bounds = array<i64: 128, 128>}, {pipeline_mode = #tpu.pipeline_mode<synchronous>, transform_indices = @transform_2, window_bounds = array<i64: 1, 128>}, {pipeline_mode = #tpu.pipeline_mode<synchronous>, transform_indices = @transform_3, window_bounds = array<i64: 3, 128>}, {pipeline_mode = #tpu.pipeline_mode<synchronous>, transform_indices = @transform_4, window_bounds = array<i64: 1, 128>}, {pipeline_mode = #tpu.pipeline_mode<synchronous>, transform_indices = @transform_5, window_bounds = array<i64: 128, 128>}, {pipeline_mode = #tpu.pipeline_mode<synchronous>, transform_indices = @transform_6, window_bounds = array<i64: 1, 128>}, {transform_indices = @transform_7, window_bounds = array<i64: 64, 128>}]} {
    %c0 = arith.constant 0 : index
    %c0_0 = arith.constant 0 : index
    %0 = vector.load %arg1[%c0, %c0_0] : memref<64x128xf32, #tpu.memory_space<vmem>>, vector<64x128xf32>
    %c0_1 = arith.constant 0 : index
    %c0_2 = arith.constant 0 : index
    %1 = vector.load %arg2[%c0_1, %c0_2] : memref<128x128xf32, #tpu.memory_space<vmem>>, vector<128x128xf32>
    %cst = arith.constant dense<0.000000e+00> : vector<64x128xf32>
    %2 = tpu.matmul %0, %1, %cst {dimension_numbers = #tpu.dot_dimension_numbers<[1], [0], [0], [1], [0, 0, 1, 1], [], []>} : vector<64x128xf32>, vector<128x128xf32>, vector<64x128xf32> -> vector<64x128xf32>
    %c0_3 = arith.constant 0 : index
    %c0_4 = arith.constant 0 : index
    %3 = vector.load %arg3[%c0_3, %c0_4] : memref<1x128xf32, #tpu.memory_space<vmem>>, vector<1x128xf32>
    %4 = vector.broadcast %3 : vector<1x128xf32> to vector<64x128xf32>
    %5 = arith.addf %2, %4 : vector<64x128xf32>
    %cst_5 = arith.constant 0.000000e+00 : f32
    %cst_6 = arith.constant 6.000000e+00 : f32
    %6 = vector.broadcast %cst_5 : f32 to vector<64x128xf32>
    %7 = arith.maximumf %6, %5 : vector<64x128xf32>
    %8 = vector.broadcast %cst_6 : f32 to vector<64x128xf32>
    %9 = arith.minimumf %8, %7 : vector<64x128xf32>
    %10 = tpu.iota {dimensions = array<i32: 0>} : vector<64x1xi32>
    %c32_i32 = arith.constant 32 : i32
    %c0_i32 = arith.constant 0 : i32
    %11 = arith.cmpi eq, %c32_i32, %c0_i32 : i32
    %c1_i32 = arith.constant 1 : i32
    %12 = arith.select %11, %c1_i32, %c32_i32 : i32
    %13 = vector.broadcast %12 : i32 to vector<64x1xi32>
    %14 = arith.remsi %10, %13 : vector<64x1xi32>
    %c0_i32_7 = arith.constant 0 : i32
    %15 = vector.broadcast %c0_i32_7 : i32 to vector<64x1xi32>
    %16 = arith.cmpi ne, %14, %15 : vector<64x1xi32>
    %c0_i32_8 = arith.constant 0 : i32
    %17 = vector.broadcast %c0_i32_8 : i32 to vector<64x1xi32>
    %18 = arith.cmpi slt, %14, %17 : vector<64x1xi32>
    %c0_i32_9 = arith.constant 0 : i32
    %19 = arith.cmpi slt, %12, %c0_i32_9 : i32
    %20 = vector.broadcast %19 : i1 to vector<64x1xi1>
    %21 = vector.broadcast %20 : vector<64x1xi1> to vector<64x1xi1>
    %22 = arith.xori %18, %21 : vector<64x1xi1>
    %23 = arith.andi %22, %16 : vector<64x1xi1>
    %24 = vector.broadcast %12 : i32 to vector<64x1xi32>
    %25 = arith.addi %14, %24 : vector<64x1xi32>
    %26 = arith.select %23, %25, %14 : vector<64x1xi1>, vector<64x1xi32>
    %c1_i32_10 = arith.constant 1 : i32
    %27 = tpu.dynamic_rotate %9 by %c1_i32_10 dim 0 : vector<64x128xf32>, i32 -> vector<64x128xf32>
    %c0_i32_11 = arith.constant 0 : i32
    %28 = vector.broadcast %c0_i32_11 : i32 to vector<64x1xi32>
    %29 = arith.cmpi eq, %26, %28 : vector<64x1xi32>
    %cst_12 = arith.constant 0.000000e+00 : f32
    %30 = vector.shape_cast %29 : vector<64x1xi1> to vector<64x1xi1>
    %31 = vector.broadcast %30 : vector<64x1xi1> to vector<64x128xi1>
    %32 = vector.broadcast %cst_12 : f32 to vector<64x128xf32>
    %33 = arith.select %31, %32, %27 : vector<64x128xi1>, vector<64x128xf32>
    %c63_i32 = arith.constant 63 : i32
    %34 = tpu.dynamic_rotate %9 by %c63_i32 dim 0 : vector<64x128xf32>, i32 -> vector<64x128xf32>
    %c31_i32 = arith.constant 31 : i32
    %35 = vector.broadcast %c31_i32 : i32 to vector<64x1xi32>
    %36 = arith.cmpi eq, %26, %35 : vector<64x1xi32>
    %cst_13 = arith.constant 0.000000e+00 : f32
    %37 = vector.shape_cast %36 : vector<64x1xi1> to vector<64x1xi1>
    %38 = vector.broadcast %37 : vector<64x1xi1> to vector<64x128xi1>
    %39 = vector.broadcast %cst_13 : f32 to vector<64x128xf32>
    %40 = arith.select %38, %39, %34 : vector<64x128xi1>, vector<64x128xf32>
    %c0_14 = arith.constant 0 : index
    %c0_15 = arith.constant 0 : index
    %41 = vector.load %arg4[%c0_14, %c0_15] : memref<3x128xf32, #tpu.memory_space<vmem>>, vector<1x128xf32>
    %42 = vector.broadcast %41 : vector<1x128xf32> to vector<64x128xf32>
    %43 = arith.mulf %33, %42 : vector<64x128xf32>
    %c1 = arith.constant 1 : index
    %c0_16 = arith.constant 0 : index
    %44 = vector.load %arg4[%c1, %c0_16] : memref<3x128xf32, #tpu.memory_space<vmem>>, vector<1x128xf32>
    %45 = vector.broadcast %44 : vector<1x128xf32> to vector<64x128xf32>
    %46 = arith.mulf %9, %45 : vector<64x128xf32>
    %47 = arith.addf %43, %46 : vector<64x128xf32>
    %c2 = arith.constant 2 : index
    %c0_17 = arith.constant 0 : index
    %48 = vector.load %arg4[%c2, %c0_17] : memref<3x128xf32, #tpu.memory_space<vmem>>, vector<1x128xf32>
    %49 = vector.broadcast %48 : vector<1x128xf32> to vector<64x128xf32>
    %50 = arith.mulf %40, %49 : vector<64x128xf32>
    %51 = arith.addf %47, %50 : vector<64x128xf32>
    %c0_18 = arith.constant 0 : index
    %c0_19 = arith.constant 0 : index
    %52 = vector.load %arg5[%c0_18, %c0_19] : memref<1x128xf32, #tpu.memory_space<vmem>>, vector<1x128xf32>
    %53 = vector.broadcast %52 : vector<1x128xf32> to vector<64x128xf32>
    %54 = arith.addf %51, %53 : vector<64x128xf32>
    %cst_20 = arith.constant 0.000000e+00 : f32
    %cst_21 = arith.constant 6.000000e+00 : f32
    %55 = vector.broadcast %cst_20 : f32 to vector<64x128xf32>
    %56 = arith.maximumf %55, %54 : vector<64x128xf32>
    %57 = vector.broadcast %cst_21 : f32 to vector<64x128xf32>
    %58 = arith.minimumf %57, %56 : vector<64x128xf32>
    %c0_22 = arith.constant 0 : index
    %c0_23 = arith.constant 0 : index
    %59 = vector.load %arg6[%c0_22, %c0_23] : memref<128x128xf32, #tpu.memory_space<vmem>>, vector<128x128xf32>
    %cst_24 = arith.constant dense<0.000000e+00> : vector<64x128xf32>
    %60 = tpu.matmul %58, %59, %cst_24 {dimension_numbers = #tpu.dot_dimension_numbers<[1], [0], [0], [1], [0, 0, 1, 1], [], []>} : vector<64x128xf32>, vector<128x128xf32>, vector<64x128xf32> -> vector<64x128xf32>
    %c0_25 = arith.constant 0 : index
    %c0_26 = arith.constant 0 : index
    %61 = vector.load %arg7[%c0_25, %c0_26] : memref<1x128xf32, #tpu.memory_space<vmem>>, vector<1x128xf32>
    %62 = vector.broadcast %61 : vector<1x128xf32> to vector<64x128xf32>
    %63 = arith.addf %60, %62 : vector<64x128xf32>
    %64 = arith.addf %63, %0 : vector<64x128xf32>
    %c0_27 = arith.constant 0 : index
    %c0_28 = arith.constant 0 : index
    %65 = vector.load %arg8[%c0_27, %c0_28] : memref<64x128xf32, #tpu.memory_space<vmem>>, vector<64x128xf32>
    tpu.vector_store %arg8[%c0_27, %c0_28], %64 {strides = array<i32>} : memref<64x128xf32, #tpu.memory_space<vmem>>, vector<64x128xf32>,
    return
  }
  func.func @transform_0(%arg0: i32) -> (i32, i32) {
    %c0_i32 = arith.constant 0 : i32
    %c0_i32_0 = arith.constant 0 : i32
    return %arg0, %c0_i32 : i32, i32
  }
  func.func @transform_1(%arg0: i32) -> (i32, i32) {
    %c0_i32 = arith.constant 0 : i32
    %c0_i32_0 = arith.constant 0 : i32
    %c0_i32_1 = arith.constant 0 : i32
    return %c0_i32, %c0_i32_0 : i32, i32
  }
  func.func @transform_2(%arg0: i32) -> (i32, i32) {
    %c0_i32 = arith.constant 0 : i32
    %c0_i32_0 = arith.constant 0 : i32
    %c0_i32_1 = arith.constant 0 : i32
    return %c0_i32, %c0_i32_0 : i32, i32
  }
  func.func @transform_3(%arg0: i32) -> (i32, i32) {
    %c0_i32 = arith.constant 0 : i32
    %c0_i32_0 = arith.constant 0 : i32
    %c0_i32_1 = arith.constant 0 : i32
    return %c0_i32, %c0_i32_0 : i32, i32
  }
  func.func @transform_4(%arg0: i32) -> (i32, i32) {
    %c0_i32 = arith.constant 0 : i32
    %c0_i32_0 = arith.constant 0 : i32
    %c0_i32_1 = arith.constant 0 : i32
    return %c0_i32, %c0_i32_0 : i32, i32
  }
  func.func @transform_5(%arg0: i32) -> (i32, i32) {
    %c0_i32 = arith.constant 0 : i32
    %c0_i32_0 = arith.constant 0 : i32
    %c0_i32_1 = arith.constant 0 : i32
    return %c0_i32, %c0_i32_0 : i32, i32
  }
  func.func @transform_6(%arg0: i32) -> (i32, i32) {
    %c0_i32 = arith.constant 0 : i32
    %c0_i32_0 = arith.constant 0 : i32
    %c0_i32_1 = arith.constant 0 : i32
    return %c0_i32, %c0_i32_0 : i32, i32
  }
  func.func @transform_7(%arg0: i32) -> (i32, i32) {
    %c0_i32 = arith.constant 0 : i32
    %c0_i32_0 = arith.constant 0 : i32
    return %arg0, %c0_i32 : i32, i32
  }
}

</mosaic_0001>

<llo_original>
// kernel: tpu_custom_call.1
$region0: #{tpu_custom_call.1}
  #allocation0 [shape = 'u32[]', space=smem, size = 0x4, offset = 0x4, fixed_abs, tag = 'smem constant byte address 0x4 - core index']
  #allocation1 [shape = 'u32[144,128]{1,0:T(1,128)}', space=vmem, size = 0x12000, scoped, tag = 'internal scratch']
  %s0 = inlined_call_operand.hbm [shape: f32[64,128], index: 0, kind: input, shape index: {}]
  %s1 = inlined_call_operand.hbm [shape: f32[128,128], index: 1, kind: input, shape index: {}]
  %s2 = inlined_call_operand.vmem [shape: f32[1,128], index: 2, kind: input, shape index: {}]
  %s3 = inlined_call_operand.vmem [shape: f32[3,128], index: 3, kind: input, shape index: {}]
  %s4 = inlined_call_operand.vmem [shape: f32[1,128], index: 4, kind: input, shape index: {}]
  %s5 = inlined_call_operand.hbm [shape: f32[128,128], index: 5, kind: input, shape index: {}]
  %s6 = inlined_call_operand.vmem [shape: f32[1,128], index: 6, kind: input, shape index: {}]
  %s7 = inlined_call_operand.hbm [shape: f32[64,128], index: 7, kind: output, shape index: {}]
  %s8 = sld [smem:[#allocation0]]
  $region50: #{tpu_custom_call.1} parent=0
    _
  %s10 = ssub.s32 1, %s8
  %s11 = scalar_select 0, %s10, %s8
  $region1: #{tpu_custom_call.1} parent=0
    #allocation2 [shape = 'u8[32768]{0}', space=vmem, size = 0x8000, scoped, tag = 'input window, operand 0, single buffered']
    #allocation3 [shape = 's32[1]{0}', space=sflag, size = 0x4, scoped, tag = 'scoped memory for tpu_custom_call.1']
    #allocation4 [shape = 's32[1]{0}', space=sflag, size = 0x4, scoped, tag = 'scoped memory for tpu_custom_call.1']
    #allocation5 [shape = 'u8[65536]{0}', space=vmem, size = 0x10000, scoped, tag = 'input window, operand 1, single buffered']
    #allocation6 [shape = 's32[1]{0}', space=sflag, size = 0x4, scoped, tag = 'scoped memory for tpu_custom_call.1']
    #allocation7 [shape = 'u8[65536]{0}', space=vmem, size = 0x10000, scoped, tag = 'input window, operand 5, single buffered']
    #allocation8 [shape = 'u8[32768]{0}', space=vmem, size = 0x8000, scoped, tag = 'output window, operand 0, single buffered']
    %12 = vsyncpa [#allocation3], 0
    %13 = vsyncpa [#allocation6], 0
    %14 = vsyncpa [#allocation4], 0
    // Predicated region
    $region2: #{tpu_custom_call.1} parent=1 // pred_check
      _
    $region3: #{tpu_custom_call.1} parent=1 // pred_check_branch
      %16 = sbr.rel (0) target = $region5
    $region4: #{tpu_custom_call.1} parent=1 // pred_region
      %s18 = ssub.s32 1024, 1024
      %19 = vsyncadd [#allocation3], %s18
      %s20 = sshll.u32 [#allocation2], 4
      %s21 = int_to_ptr.vmem [resolvable:$true] %s20
      %26 = dma.hbm_to_vmem [thread:$0]  %s0, 1024, %s21, [#allocation3], 128, 128, 8
    $region5: #{tpu_custom_call.1} parent=1 // pred_fallthru
      _
    // Predicated region
    $region6: #{tpu_custom_call.1} parent=1 // pred_check
      _
    $region7: #{tpu_custom_call.1} parent=1 // pred_check_branch
      %28 = sbr.rel (0) target = $region9
    $region8: #{tpu_custom_call.1} parent=1 // pred_region
      %s30 = ssub.s32 2048, 2048
      %31 = vsyncadd [#allocation6], %s30
      %s32 = sshll.u32 [#allocation5], 4
      %s33 = int_to_ptr.vmem [resolvable:$true] %s32
      %38 = dma.hbm_to_vmem [thread:$0]  %s1, 2048, %s33, [#allocation6], 128, 128, 8
    $region9: #{tpu_custom_call.1} parent=1 // pred_fallthru
      _
    // Predicated region
    $region10: #{tpu_custom_call.1} parent=1 // pred_check
      _
    $region11: #{tpu_custom_call.1} parent=1 // pred_check_branch
      %40 = sbr.rel (0) target = $region13
    $region12: #{tpu_custom_call.1} parent=1 // pred_region
      _
    $region13: #{tpu_custom_call.1} parent=1 // pred_fallthru
      _
    // Predicated region
    $region14: #{tpu_custom_call.1} parent=1 // pred_check
      _
    $region15: #{tpu_custom_call.1} parent=1 // pred_check_branch
      %42 = sbr.rel (0) target = $region17
    $region16: #{tpu_custom_call.1} parent=1 // pred_region
      _
    $region17: #{tpu_custom_call.1} parent=1 // pred_fallthru
      _
    // Predicated region
    $region18: #{tpu_custom_call.1} parent=1 // pred_check
      _
    $region19: #{tpu_custom_call.1} parent=1 // pred_check_branch
      %44 = sbr.rel (0) target = $region21
    $region20: #{tpu_custom_call.1} parent=1 // pred_region
      _
    $region21: #{tpu_custom_call.1} parent=1 // pred_fallthru
      _
    // Predicated region
    $region22: #{tpu_custom_call.1} parent=1 // pred_check
      _
    $region23: #{tpu_custom_call.1} parent=1 // pred_check_branch
      %46 = sbr.rel (0) target = $region25
    $region24: #{tpu_custom_call.1} parent=1 // pred_region
      %s48 = ssub.s32 2048, 2048
      %49 = vsyncadd [#allocation6], %s48
      %s50 = sshll.u32 [#allocation7], 4
      %s51 = int_to_ptr.vmem [resolvable:$true] %s50
      %56 = dma.hbm_to_vmem [thread:$0]  %s5, 2048, %s51, [#allocation6], 128, 128, 8
    $region25: #{tpu_custom_call.1} parent=1 // pred_fallthru
      _
    // Predicated region
    $region26: #{tpu_custom_call.1} parent=1 // pred_check
      _
    $region27: #{tpu_custom_call.1} parent=1 // pred_check_branch
      %58 = sbr.rel (0) target = $region29
    $region28: #{tpu_custom_call.1} parent=1 // pred_region
      _
    $region29: #{tpu_custom_call.1} parent=1 // pred_fallthru
      _
    // Predicated region
    $region30: #{tpu_custom_call.1} parent=1 // pred_check
      _
    $region31: #{tpu_custom_call.1} parent=1 // pred_check_branch
      %60 = sbr.rel (0) target = $region33
    $region32: #{tpu_custom_call.1} parent=1 // pred_region
      %61 = dma.done [#allocation3], 1024
    $region33: #{tpu_custom_call.1} parent=1 // pred_fallthru
      _
    // Predicated region
    $region34: #{tpu_custom_call.1} parent=1 // pred_check
      _
    $region35: #{tpu_custom_call.1} parent=1 // pred_check_branch
      %63 = sbr.rel (0) target = $region37
    $region36: #{tpu_custom_call.1} parent=1 // pred_region
      %64 = dma.done [#allocation6], 2048
    $region37: #{tpu_custom_call.1} parent=1 // pred_fallthru
      _
    // Predicated region
    $region38: #{tpu_custom_call.1} parent=1 // pred_check
      _
    $region39: #{tpu_custom_call.1} parent=1 // pred_check_branch
      %66 = sbr.rel (0) target = $region41
    $region40: #{tpu_custom_call.1} parent=1 // pred_region
      %67 = dma.done [#allocation6], 2048
    $region41: #{tpu_custom_call.1} parent=1 // pred_fallthru
      _
    %v68 = vld [vmem:[#allocation2] sm:$0xff]
    %v69 = vld [vmem:[#allocation2 + $0x8] sm:$0xff]
    %v70 = vld [vmem:[#allocation2 + $0x10] sm:$0xff]
    %v71 = vld [vmem:[#allocation2 + $0x18] sm:$0xff]
    %v72 = vld [vmem:[#allocation2 + $0x20] sm:$0xff]
    %v73 = vld [vmem:[#allocation2 + $0x28] sm:$0xff]
    %v74 = vld [vmem:[#allocation2 + $0x30] sm:$0xff]
    %v75 = vld [vmem:[#allocation2 + $0x38] sm:$0xff]
    %v76 = vld [vmem:[#allocation5] sm:$0xff]
    %v77 = vld [vmem:[#allocation5 + $0x8] sm:$0xff]
    %v78 = vld [vmem:[#allocation5 + $0x10] sm:$0xff]
    %v79 = vld [vmem:[#allocation5 + $0x18] sm:$0xff]
    %v80 = vld [vmem:[#allocation5 + $0x20] sm:$0xff]
    %v81 = vld [vmem:[#allocation5 + $0x28] sm:$0xff]
    %v82 = vld [vmem:[#allocation5 + $0x30] sm:$0xff]
    %v83 = vld [vmem:[#allocation5 + $0x38] sm:$0xff]
    %v84 = vld [vmem:[#allocation5 + $0x40] sm:$0xff]
    %v85 = vld [vmem:[#allocation5 + $0x48] sm:$0xff]
    %v86 = vld [vmem:[#allocation5 + $0x50] sm:$0xff]
    %v87 = vld [vmem:[#allocation5 + $0x58] sm:$0xff]
    %v88 = vld [vmem:[#allocation5 + $0x60] sm:$0xff]
    %v89 = vld [vmem:[#allocation5 + $0x68] sm:$0xff]
    %v90 = vld [vmem:[#allocation5 + $0x70] sm:$0xff]
    %v91 = vld [vmem:[#allocation5 + $0x78] sm:$0xff]
    %v92 = vld [vmem:[%s2] sm:$0x1]
    %v94 = vlaneseq
    %v95 = vshrl.u32 %v94, 7
    %v96 = vsub.s32 0, %v95
    %v97 = vrot.slane %v92, %v96
    %99 = vmatprep.subr.mxu0 0.0
    %100 = vmatpush1.msra.mxu0 %v76
    %101 = vmatprep.subr.mxu0 0.0
    %102 = vmatpush1.msra.mxu0 %v77
    %103 = vmatprep.subr.mxu0 0.0
    %104 = vmatpush1.msra.mxu0 %v78
    %105 = vmatprep.subr.mxu0 0.0
    %106 = vmatpush1.msra.mxu0 %v79
    %107 = vmatprep.subr.mxu0 0.0
    %108 = vmatpush1.msra.mxu0 %v80
    %109 = vmatprep.subr.mxu0 0.0
    %110 = vmatpush1.msra.mxu0 %v81
    %111 = vmatprep.subr.mxu0 0.0
    %112 = vmatpush1.msra.mxu0 %v82
    %113 = vmatprep.subr.mxu0 0.0
    %114 = vmatpush1.msra.mxu0 %v83
    %115 = vmatprep.subr.mxu0 0.0
    %116 = vmatpush1.msra.mxu0 %v84
    %117 = vmatprep.subr.mxu0 0.0
    %118 = vmatpush1.msra.mxu0 %v85
    %119 = vmatprep.subr.mxu0 0.0
    %120 = vmatpush1.msra.mxu0 %v86
    %121 = vmatprep.subr.mxu0 0.0
    %122 = vmatpush1.msra.mxu0 %v87
    %123 = vmatprep.subr.mxu0 0.0
    %124 = vmatpush1.msra.mxu0 %v88
    %125 = vmatprep.subr.mxu0 0.0
    %126 = vmatpush1.msra.mxu0 %v89
    %127 = vmatprep.subr.mxu0 0.0
    %128 = vmatpush1.msra.mxu0 %v90
    %129 = vmatprep.subr.mxu0 0.0
    %130 = vmatpush1.msra.mxu0 %v91
    %131 = vmatprep.subr.mxu0 0.0
    %132 = vmatpush1.msra.mxu0 0.0
    %133 = vmatprep.subr.mxu0 0.0
    %134 = vmatpush1.msra.mxu0 0.0
    %135 = vmatprep.subr.mxu0 0.0
    %136 = vmatpush1.msra.mxu0 0.0
    %137 = vmatprep.subr.mxu0 0.0
    %138 = vmatpush1.msra.mxu0 0.0
    %139 = vmatprep.subr.mxu0 0.0
    %140 = vmatpush1.msra.mxu0 0.0
    %141 = vmatprep.subr.mxu0 0.0
    %142 = vmatpush1.msra.mxu0 0.0
    %143 = vmatprep.subr.mxu0 0.0
    %144 = vmatpush1.msra.mxu0 0.0
    %145 = vmatprep.subr.mxu0 0.0
    %146 = vmatpush1.msra.mxu0 0.0
    %147 = vmatprep.subr.mxu0 0.0
    %148 = vmatpush1.msra.mxu0 0.0
    %149 = vmatprep.subr.mxu0 0.0
    %150 = vmatpush1.msra.mxu0 0.0
    %151 = vmatprep.subr.mxu0 0.0
    %152 = vmatpush1.msra.mxu0 0.0
    %153 = vmatprep.subr.mxu0 0.0
    %154 = vmatpush1.msra.mxu0 0.0
    %155 = vmatprep.subr.mxu0 0.0
    %156 = vmatpush1.msra.mxu0 0.0
    %157 = vmatprep.subr.mxu0 0.0
    %158 = vmatpush1.msra.mxu0 0.0
    %159 = vmatprep.subr.mxu0 0.0
    %160 = vmatpush1.msra.mxu0 0.0
    %161 = vmatprep.subr.mxu0 0.0
    %162 = vmatpush1.msra.mxu0 0.0
    %163 = vmatprep.mubr.f32.mxu0 0.0
    %164 = vmatmul.mubr.f32.gmra.mrb[0].mxu0 %v68
    %v165 = vpop.f32.mrb[0].mxu0
    %v166 = vadd.f32 %v97, %v165
    %v167 = vpop.f32.mrb[0].mxu0
    %168 = vmatprep.mubr.f32.mxu0 0.0
    %169 = vmatmul.mubr.f32.gmra.mrb[0].mxu0 %v69
    %v170 = vpop.f32.mrb[0].mxu0
    %v171 = vadd.f32 %v97, %v170
    %v172 = vpop.f32.mrb[0].mxu0
    %173 = vmatprep.mubr.f32.mxu0 0.0
    %174 = vmatmul.mubr.f32.gmra.mrb[0].mxu0 %v70
    %v175 = vpop.f32.mrb[0].mxu0
    %v176 = vadd.f32 %v97, %v175
    %v177 = vpop.f32.mrb[0].mxu0
    %178 = vmatprep.mubr.f32.mxu0 0.0
    %179 = vmatmul.mubr.f32.gmra.mrb[0].mxu0 %v71
    %v180 = vpop.f32.mrb[0].mxu0
    %v181 = vadd.f32 %v97, %v180
    %v182 = vpop.f32.mrb[0].mxu0
    %183 = vmatprep.mubr.f32.mxu0 0.0
    %184 = vmatmul.mubr.f32.gmra.mrb[0].mxu0 %v72
    %v185 = vpop.f32.mrb[0].mxu0
    %v186 = vadd.f32 %v97, %v185
    %v187 = vpop.f32.mrb[0].mxu0
    %188 = vmatprep.mubr.f32.mxu0 0.0
    %189 = vmatmul.mubr.f32.gmra.mrb[0].mxu0 %v73
    %v190 = vpop.f32.mrb[0].mxu0
    %v191 = vadd.f32 %v97, %v190
    %v192 = vpop.f32.mrb[0].mxu0
    %193 = vmatprep.mubr.f32.mxu0 0.0
    %194 = vmatmul.mubr.f32.gmra.mrb[0].mxu0 %v74
    %v195 = vpop.f32.mrb[0].mxu0
    %v196 = vadd.f32 %v97, %v195
    %v197 = vpop.f32.mrb[0].mxu0
    %198 = vmatprep.mubr.f32.mxu0 0.0
    %199 = vmatmul.mubr.f32.gmra.mrb[0].mxu0 %v75
    %v200 = vpop.f32.mrb[0].mxu0
    %v201 = vadd.f32 %v97, %v200
    %v202 = vpop.f32.mrb[0].mxu0
    %203 = vdwg.mxu0
    %v204 = vmax.f32 %v166, 0.0
    %v205 = vmax.f32 %v171, 0.0
    %v206 = vmax.f32 %v176, 0.0
    %v207 = vmax.f32 %v181, 0.0
    %v208 = vmax.f32 %v186, 0.0
    %v209 = vmax.f32 %v191, 0.0
    %v210 = vmax.f32 %v196, 0.0
    %v211 = vmax.f32 %v201, 0.0
    %v212 = vmin.f32 %v204, 6.0
    %v213 = vmin.f32 %v205, 6.0
    %v214 = vmin.f32 %v206, 6.0
    %v215 = vmin.f32 %v207, 6.0
    %v216 = vmin.f32 %v208, 6.0
    %v217 = vmin.f32 %v209, 6.0
    %v218 = vmin.f32 %v210, 6.0
    %v219 = vmin.f32 %v211, 6.0
    %v220 = vlaneseq
    %v221 = vshrl.u32 %v220, 7
    %v222 = vadd.s32 %v221, 8
    %v223 = vadd.s32 %v221, 16
    %v224 = vadd.s32 %v221, 24
    %v225 = vadd.s32 %v221, 32
    %v226 = vadd.s32 %v221, 40
    %v227 = vadd.s32 %v221, 48
    %v228 = vadd.s32 %v221, 56
    %vm229 = vcmp.lt.s32.totalorder %v221, 0
    %v230 = vsub.s32 0, %v221
    %v231 = vsel %vm229, %v230, %v221
    %v232 = vshrl.u32 %v231, 5
    %v233 = vand.u32 %v231, 31
    %v234 = vsub.s32 0, %v233
    %v235 = vsel %vm229, %v234, %v233
    %vm236 = vcmp.lt.s32.totalorder %v222, 0
    %v237 = vsub.s32 0, %v222
    %v238 = vsel %vm236, %v237, %v222
    %v239 = vshrl.u32 %v238, 5
    %v240 = vand.u32 %v238, 31
    %v241 = vsub.s32 0, %v240
    %v242 = vsel %vm236, %v241, %v240
    %vm243 = vcmp.lt.s32.totalorder %v223, 0
    %v244 = vsub.s32 0, %v223
    %v245 = vsel %vm243, %v244, %v223
    %v246 = vshrl.u32 %v245, 5
    %v247 = vand.u32 %v245, 31
    %v248 = vsub.s32 0, %v247
    %v249 = vsel %vm243, %v248, %v247
    %vm250 = vcmp.lt.s32.totalorder %v224, 0
    %v251 = vsub.s32 0, %v224
    %v252 = vsel %vm250, %v251, %v224
    %v253 = vshrl.u32 %v252, 5
    %v254 = vand.u32 %v252, 31
    %v255 = vsub.s32 0, %v254
    %v256 = vsel %vm250, %v255, %v254
    %vm257 = vcmp.lt.s32.totalorder %v225, 0
    %v258 = vsub.s32 0, %v225
    %v259 = vsel %vm257, %v258, %v225
    %v260 = vshrl.u32 %v259, 5
    %v261 = vand.u32 %v259, 31
    %v262 = vsub.s32 0, %v261
    %v263 = vsel %vm257, %v262, %v261
    %vm264 = vcmp.lt.s32.totalorder %v226, 0
    %v265 = vsub.s32 0, %v226
    %v266 = vsel %vm264, %v265, %v226
    %v267 = vshrl.u32 %v266, 5
    %v268 = vand.u32 %v266, 31
    %v269 = vsub.s32 0, %v268
    %v270 = vsel %vm264, %v269, %v268
    %vm271 = vcmp.lt.s32.totalorder %v227, 0
    %v272 = vsub.s32 0, %v227
    %v273 = vsel %vm271, %v272, %v227
    %v274 = vshrl.u32 %v273, 5
    %v275 = vand.u32 %v273, 31
    %v276 = vsub.s32 0, %v275
    %v277 = vsel %vm271, %v276, %v275
    %vm278 = vcmp.lt.s32.totalorder %v228, 0
    %v279 = vsub.s32 0, %v228
    %v280 = vsel %vm278, %v279, %v228
    %v281 = vshrl.u32 %v280, 5
    %v282 = vand.u32 %v280, 31
    %v283 = vsub.s32 0, %v282
    %v284 = vsel %vm278, %v283, %v282
    %vm285 = vcmp.ne.s32.totalorder %v235, 0
    %vm286 = vcmp.ne.s32.totalorder %v242, 0
    %vm287 = vcmp.ne.s32.totalorder %v249, 0
    %vm288 = vcmp.ne.s32.totalorder %v256, 0
    %vm289 = vcmp.ne.s32.totalorder %v263, 0
    %vm290 = vcmp.ne.s32.totalorder %v270, 0
    %vm291 = vcmp.ne.s32.totalorder %v277, 0
    %vm292 = vcmp.ne.s32.totalorder %v284, 0
    %vm293 = vcmp.lt.s32.totalorder %v235, 0
    %vm294 = vcmp.lt.s32.totalorder %v242, 0
    %vm295 = vcmp.lt.s32.totalorder %v249, 0
    %vm296 = vcmp.lt.s32.totalorder %v256, 0
    %vm297 = vcmp.lt.s32.totalorder %v263, 0
    %vm298 = vcmp.lt.s32.totalorder %v270, 0
    %vm299 = vcmp.lt.s32.totalorder %v277, 0
    %vm300 = vcmp.lt.s32.totalorder %v284, 0
    %vm301 = vmand %vm293, %vm285
    %vm302 = vmand %vm294, %vm286
    %vm303 = vmand %vm295, %vm287
    %vm304 = vmand %vm296, %vm288
    %vm305 = vmand %vm297, %vm289
    %vm306 = vmand %vm298, %vm290
    %vm307 = vmand %vm299, %vm291
    %vm308 = vmand %vm300, %vm292
    %v309 = vadd.s32 %v235, 32
    %v310 = vadd.s32 %v242, 32
    %v311 = vadd.s32 %v249, 32
    %v312 = vadd.s32 %v256, 32
    %v313 = vadd.s32 %v263, 32
    %v314 = vadd.s32 %v270, 32
    %v315 = vadd.s32 %v277, 32
    %v316 = vadd.s32 %v284, 32
    %v317 = vsel %vm301, %v309, %v235
    %v318 = vsel %vm302, %v310, %v242
    %v319 = vsel %vm303, %v311, %v249
    %v320 = vsel %vm304, %v312, %v256
    %v321 = vsel %vm305, %v313, %v263
    %v322 = vsel %vm306, %v314, %v270
    %v323 = vsel %vm307, %v315, %v277
    %v324 = vsel %vm308, %v316, %v284
    %v325 = vrot.slane %v212, 7
    %v326 = vrot.slane %v213, 7
    %v327 = vrot.slane %v214, 7
    %v328 = vrot.slane %v215, 7
    %v329 = vrot.slane %v216, 7
    %v330 = vrot.slane %v217, 7
    %v331 = vrot.slane %v218, 7
    %v332 = vrot.slane %v219, 7
    %vm333 = vcmp.lt.s32.totalorder %v221, 1
    %v334 = vsel %vm333, %v331, %v332
    %v335 = vsel %vm333, %v330, %v331
    %v336 = vsel %vm333, %v329, %v330
    %v337 = vsel %vm333, %v328, %v329
    %v338 = vsel %vm333, %v327, %v328
    %v339 = vsel %vm333, %v326, %v327
    %v340 = vsel %vm333, %v325, %v326
    %v341 = vsel %vm333, %v332, %v325
    %vm342 = vcmp.eq.s32.totalorder %v317, 0
    %vm343 = vcmp.eq.s32.totalorder %v318, 0
    %vm344 = vcmp.eq.s32.totalorder %v319, 0
    %vm345 = vcmp.eq.s32.totalorder %v320, 0
    %vm346 = vcmp.eq.s32.totalorder %v321, 0
    %vm347 = vcmp.eq.s32.totalorder %v322, 0
    %vm348 = vcmp.eq.s32.totalorder %v323, 0
    %vm349 = vcmp.eq.s32.totalorder %v324, 0
    %v350 = vsel %vm342, 1, 0
    %v351 = vsel %vm343, 1, 0
    %v352 = vsel %vm344, 1, 0
    %v353 = vsel %vm345, 1, 0
    %v354 = vsel %vm346, 1, 0
    %v355 = vsel %vm347, 1, 0
    %v356 = vsel %vm348, 1, 0
    %v357 = vsel %vm349, 1, 0
    %vm358 = vcmp.eq.s32.totalorder %v350, 1
    %vm359 = vcmp.eq.s32.totalorder %v351, 1
    %vm360 = vcmp.eq.s32.totalorder %v352, 1
    %vm361 = vcmp.eq.s32.totalorder %v353, 1
    %vm362 = vcmp.eq.s32.totalorder %v354, 1
    %vm363 = vcmp.eq.s32.totalorder %v355, 1
    %vm364 = vcmp.eq.s32.totalorder %v356, 1
    %vm365 = vcmp.eq.s32.totalorder %v357, 1
    %v366 = vsel %vm358, 0.0, %v341
    %v367 = vsel %vm359, 0.0, %v340
    %v368 = vsel %vm360, 0.0, %v339
    %v369 = vsel %vm361, 0.0, %v338
    %v370 = vsel %vm362, 0.0, %v337
    %v371 = vsel %vm363, 0.0, %v336
    %v372 = vsel %vm364, 0.0, %v335
    %v373 = vsel %vm365, 0.0, %v334
    %v374 = vrot.slane %v212, 1
    %v375 = vrot.slane %v213, 1
    %v376 = vrot.slane %v214, 1
    %v377 = vrot.slane %v215, 1
    %v378 = vrot.slane %v216, 1
    %v379 = vrot.slane %v217, 1
    %v380 = vrot.slane %v218, 1
    %v381 = vrot.slane %v219, 1
    %vm382 = vcmp.lt.s32.totalorder %v221, 7
    %v383 = vsel %vm382, %v380, %v381
    %v384 = vsel %vm382, %v379, %v380
    %v385 = vsel %vm382, %v378, %v379
    %v386 = vsel %vm382, %v377, %v378
    %v387 = vsel %vm382, %v376, %v377
    %v388 = vsel %vm382, %v375, %v376
    %v389 = vsel %vm382, %v374, %v375
    %v390 = vsel %vm382, %v381, %v374
    %vm391 = vcmp.eq.s32.totalorder %v317, 31
    %vm392 = vcmp.eq.s32.totalorder %v318, 31
    %vm393 = vcmp.eq.s32.totalorder %v319, 31
    %vm394 = vcmp.eq.s32.totalorder %v320, 31
    %vm395 = vcmp.eq.s32.totalorder %v321, 31
    %vm396 = vcmp.eq.s32.totalorder %v322, 31
    %vm397 = vcmp.eq.s32.totalorder %v323, 31
    %vm398 = vcmp.eq.s32.totalorder %v324, 31
    %v399 = vsel %vm391, 1, 0
    %v400 = vsel %vm392, 1, 0
    %v401 = vsel %vm393, 1, 0
    %v402 = vsel %vm394, 1, 0
    %v403 = vsel %vm395, 1, 0
    %v404 = vsel %vm396, 1, 0
    %v405 = vsel %vm397, 1, 0
    %v406 = vsel %vm398, 1, 0
    %vm407 = vcmp.eq.s32.totalorder %v399, 1
    %vm408 = vcmp.eq.s32.totalorder %v400, 1
    %vm409 = vcmp.eq.s32.totalorder %v401, 1
    %vm410 = vcmp.eq.s32.totalorder %v402, 1
    %vm411 = vcmp.eq.s32.totalorder %v403, 1
    %vm412 = vcmp.eq.s32.totalorder %v404, 1
    %vm413 = vcmp.eq.s32.totalorder %v405, 1
    %vm414 = vcmp.eq.s32.totalorder %v406, 1
    %v415 = vsel %vm407, 0.0, %v389
    %v416 = vsel %vm408, 0.0, %v388
    %v417 = vsel %vm409, 0.0, %v387
    %v418 = vsel %vm410, 0.0, %v386
    %v419 = vsel %vm411, 0.0, %v385
    %v420 = vsel %vm412, 0.0, %v384
    %v421 = vsel %vm413, 0.0, %v383
    %v422 = vsel %vm414, 0.0, %v390
    %v423 = vld [vmem:[%s3] sm:$0x1]
    %v424 = vlaneseq
    %v425 = vshrl.u32 %v424, 7
    %v426 = vsub.s32 0, %v425
    %v427 = vrot.slane %v423, %v426
    %v428 = vmul.f32 %v366, %v427
    %v429 = vmul.f32 %v367, %v427
    %v430 = vmul.f32 %v368, %v427
    %v431 = vmul.f32 %v369, %v427
    %v432 = vmul.f32 %v370, %v427
    %v433 = vmul.f32 %v371, %v427
    %v434 = vmul.f32 %v372, %v427
    %v435 = vmul.f32 %v373, %v427
    %v436 = vld [vmem:[%s3 + $0x1] sm:$0x1]
    %v437 = vlaneseq
    %v438 = vshrl.u32 %v437, 7
    %v439 = vsub.s32 0, %v438
    %v440 = vrot.slane %v436, %v439
    %v441 = vmul.f32 %v212, %v440
    %v442 = vmul.f32 %v213, %v440
    %v443 = vmul.f32 %v214, %v440
    %v444 = vmul.f32 %v215, %v440
    %v445 = vmul.f32 %v216, %v440
    %v446 = vmul.f32 %v217, %v440
    %v447 = vmul.f32 %v218, %v440
    %v448 = vmul.f32 %v219, %v440
    %v449 = vadd.f32 %v428, %v441
    %v450 = vadd.f32 %v429, %v442
    %v451 = vadd.f32 %v430, %v443
    %v452 = vadd.f32 %v431, %v444
    %v453 = vadd.f32 %v432, %v445
    %v454 = vadd.f32 %v433, %v446
    %v455 = vadd.f32 %v434, %v447
    %v456 = vadd.f32 %v435, %v448
    %v457 = vld [vmem:[%s3 + $0x2] sm:$0x1]
    %v458 = vlaneseq
    %v459 = vshrl.u32 %v458, 7
    %v460 = vsub.s32 0, %v459
    %v461 = vrot.slane %v457, %v460
    %v462 = vmul.f32 %v415, %v461
    %v463 = vmul.f32 %v416, %v461
    %v464 = vmul.f32 %v417, %v461
    %v465 = vmul.f32 %v418, %v461
    %v466 = vmul.f32 %v419, %v461
    %v467 = vmul.f32 %v420, %v461
    %v468 = vmul.f32 %v421, %v461
    %v469 = vmul.f32 %v422, %v461
    %v470 = vadd.f32 %v449, %v462
    %v471 = vadd.f32 %v450, %v463
    %v472 = vadd.f32 %v451, %v464
    %v473 = vadd.f32 %v452, %v465
    %v474 = vadd.f32 %v453, %v466
    %v475 = vadd.f32 %v454, %v467
    %v476 = vadd.f32 %v455, %v468
    %v477 = vadd.f32 %v456, %v469
    %v478 = vld [vmem:[%s4] sm:$0x1]
    %v480 = vlaneseq
    %v481 = vshrl.u32 %v480, 7
    %v482 = vsub.s32 0, %v481
    %v483 = vrot.slane %v478, %v482
    %v485 = vadd.f32 %v470, %v483
    %v486 = vadd.f32 %v471, %v483
    %v487 = vadd.f32 %v472, %v483
    %v488 = vadd.f32 %v473, %v483
    %v489 = vadd.f32 %v474, %v483
    %v490 = vadd.f32 %v475, %v483
    %v491 = vadd.f32 %v476, %v483
    %v492 = vadd.f32 %v477, %v483
    %v493 = vmax.f32 %v485, 0.0
    %v494 = vmax.f32 %v486, 0.0
    %v495 = vmax.f32 %v487, 0.0
    %v496 = vmax.f32 %v488, 0.0
    %v497 = vmax.f32 %v489, 0.0
    %v498 = vmax.f32 %v490, 0.0
    %v499 = vmax.f32 %v491, 0.0
    %v500 = vmax.f32 %v492, 0.0
    %v501 = vmin.f32 %v493, 6.0
    %v502 = vmin.f32 %v494, 6.0
    %v503 = vmin.f32 %v495, 6.0
    %v504 = vmin.f32 %v496, 6.0
    %v505 = vmin.f32 %v497, 6.0
    %v506 = vmin.f32 %v498, 6.0
    %v507 = vmin.f32 %v499, 6.0
    %v508 = vmin.f32 %v500, 6.0
    %v509 = vld [vmem:[#allocation7] sm:$0xff]
    %v510 = vld [vmem:[#allocation7 + $0x8] sm:$0xff]
    %v511 = vld [vmem:[#allocation7 + $0x10] sm:$0xff]
    %v512 = vld [vmem:[#allocation7 + $0x18] sm:$0xff]
    %v513 = vld [vmem:[#allocation7 + $0x20] sm:$0xff]
    %v514 = vld [vmem:[#allocation7 + $0x28] sm:$0xff]
    %v515 = vld [vmem:[#allocation7 + $0x30] sm:$0xff]
    %v516 = vld [vmem:[#allocation7 + $0x38] sm:$0xff]
    %v517 = vld [vmem:[#allocation7 + $0x40] sm:$0xff]
    %v518 = vld [vmem:[#allocation7 + $0x48] sm:$0xff]
    %v519 = vld [vmem:[#allocation7 + $0x50] sm:$0xff]
    %v520 = vld [vmem:[#allocation7 + $0x58] sm:$0xff]
    %v521 = vld [vmem:[#allocation7 + $0x60] sm:$0xff]
    %v522 = vld [vmem:[#allocation7 + $0x68] sm:$0xff]
    %v523 = vld [vmem:[#allocation7 + $0x70] sm:$0xff]
    %v524 = vld [vmem:[#allocation7 + $0x78] sm:$0xff]
    %v525 = vld [vmem:[%s6] sm:$0x1]
    %v527 = vlaneseq
    %v528 = vshrl.u32 %v527, 7
    %v529 = vsub.s32 0, %v528
    %v530 = vrot.slane %v525, %v529
    %532 = vmatprep.subr.mxu0 0.0
    %533 = vmatpush1.msra.mxu0 %v509
    %534 = vmatprep.subr.mxu0 0.0
    %535 = vmatpush1.msra.mxu0 %v510
    %536 = vmatprep.subr.mxu0 0.0
    %537 = vmatpush1.msra.mxu0 %v511
    %538 = vmatprep.subr.mxu0 0.0
    %539 = vmatpush1.msra.mxu0 %v512
    %540 = vmatprep.subr.mxu0 0.0
    %541 = vmatpush1.msra.mxu0 %v513
    %542 = vmatprep.subr.mxu0 0.0
    %543 = vmatpush1.msra.mxu0 %v514
    %544 = vmatprep.subr.mxu0 0.0
    %545 = vmatpush1.msra.mxu0 %v515
    %546 = vmatprep.subr.mxu0 0.0
    %547 = vmatpush1.msra.mxu0 %v516
    %548 = vmatprep.subr.mxu0 0.0
    %549 = vmatpush1.msra.mxu0 %v517
    %550 = vmatprep.subr.mxu0 0.0
    %551 = vmatpush1.msra.mxu0 %v518
    %552 = vmatprep.subr.mxu0 0.0
    %553 = vmatpush1.msra.mxu0 %v519
    %554 = vmatprep.subr.mxu0 0.0
    %555 = vmatpush1.msra.mxu0 %v520
    %556 = vmatprep.subr.mxu0 0.0
    %557 = vmatpush1.msra.mxu0 %v521
    %558 = vmatprep.subr.mxu0 0.0
    %559 = vmatpush1.msra.mxu0 %v522
    %560 = vmatprep.subr.mxu0 0.0
    %561 = vmatpush1.msra.mxu0 %v523
    %562 = vmatprep.subr.mxu0 0.0
    %563 = vmatpush1.msra.mxu0 %v524
    %564 = vmatprep.subr.mxu0 0.0
    %565 = vmatpush1.msra.mxu0 0.0
    %566 = vmatprep.subr.mxu0 0.0
    %567 = vmatpush1.msra.mxu0 0.0
    %568 = vmatprep.subr.mxu0 0.0
    %569 = vmatpush1.msra.mxu0 0.0
    %570 = vmatprep.subr.mxu0 0.0
    %571 = vmatpush1.msra.mxu0 0.0
    %572 = vmatprep.subr.mxu0 0.0
    %573 = vmatpush1.msra.mxu0 0.0
    %574 = vmatprep.subr.mxu0 0.0
    %575 = vmatpush1.msra.mxu0 0.0
    %576 = vmatprep.subr.mxu0 0.0
    %577 = vmatpush1.msra.mxu0 0.0
    %578 = vmatprep.subr.mxu0 0.0
    %579 = vmatpush1.msra.mxu0 0.0
    %580 = vmatprep.subr.mxu0 0.0
    %581 = vmatpush1.msra.mxu0 0.0
    %582 = vmatprep.subr.mxu0 0.0
    %583 = vmatpush1.msra.mxu0 0.0
    %584 = vmatprep.subr.mxu0 0.0
    %585 = vmatpush1.msra.mxu0 0.0
    %586 = vmatprep.subr.mxu0 0.0
    %587 = vmatpush1.msra.mxu0 0.0
    %588 = vmatprep.subr.mxu0 0.0
    %589 = vmatpush1.msra.mxu0 0.0
    %590 = vmatprep.subr.mxu0 0.0
    %591 = vmatpush1.msra.mxu0 0.0
    %592 = vmatprep.subr.mxu0 0.0
    %593 = vmatpush1.msra.mxu0 0.0
    %594 = vmatprep.subr.mxu0 0.0
    %595 = vmatpush1.msra.mxu0 0.0
    %596 = vmatprep.mubr.f32.mxu0 0.0
    %597 = vmatmul.mubr.f32.gmra.mrb[0].mxu0 %v501
    %v598 = vpop.f32.mrb[0].mxu0
    %v599 = vadd.f32 %v530, %v598
    %v600 = vpop.f32.mrb[0].mxu0
    %601 = vmatprep.mubr.f32.mxu0 0.0
    %602 = vmatmul.mubr.f32.gmra.mrb[0].mxu0 %v502
    %v603 = vpop.f32.mrb[0].mxu0
    %v604 = vadd.f32 %v530, %v603
    %v605 = vpop.f32.mrb[0].mxu0
    %606 = vmatprep.mubr.f32.mxu0 0.0
    %607 = vmatmul.mubr.f32.gmra.mrb[0].mxu0 %v503
    %v608 = vpop.f32.mrb[0].mxu0
    %v609 = vadd.f32 %v530, %v608
    %v610 = vpop.f32.mrb[0].mxu0
    %611 = vmatprep.mubr.f32.mxu0 0.0
    %612 = vmatmul.mubr.f32.gmra.mrb[0].mxu0 %v504
    %v613 = vpop.f32.mrb[0].mxu0
    %v614 = vadd.f32 %v530, %v613
    %v615 = vpop.f32.mrb[0].mxu0
    %616 = vmatprep.mubr.f32.mxu0 0.0
    %617 = vmatmul.mubr.f32.gmra.mrb[0].mxu0 %v505
    %v618 = vpop.f32.mrb[0].mxu0
    %v619 = vadd.f32 %v530, %v618
    %v620 = vpop.f32.mrb[0].mxu0
    %621 = vmatprep.mubr.f32.mxu0 0.0
    %622 = vmatmul.mubr.f32.gmra.mrb[0].mxu0 %v506
    %v623 = vpop.f32.mrb[0].mxu0
    %v624 = vadd.f32 %v530, %v623
    %v625 = vpop.f32.mrb[0].mxu0
    %626 = vmatprep.mubr.f32.mxu0 0.0
    %627 = vmatmul.mubr.f32.gmra.mrb[0].mxu0 %v507
    %v628 = vpop.f32.mrb[0].mxu0
    %v629 = vadd.f32 %v530, %v628
    %v630 = vpop.f32.mrb[0].mxu0
    %631 = vmatprep.mubr.f32.mxu0 0.0
    %632 = vmatmul.mubr.f32.gmra.mrb[0].mxu0 %v508
    %v633 = vpop.f32.mrb[0].mxu0
    %v634 = vadd.f32 %v530, %v633
    %v635 = vpop.f32.mrb[0].mxu0
    %636 = vdwg.mxu0
    %v637 = vadd.f32 %v599, %v68
    %v638 = vadd.f32 %v604, %v69
    %v639 = vadd.f32 %v609, %v70
    %v640 = vadd.f32 %v614, %v71
    %v641 = vadd.f32 %v619, %v72
    %v642 = vadd.f32 %v624, %v73
    %v643 = vadd.f32 %v629, %v74
    %v644 = vadd.f32 %v634, %v75
    %645 = vst [vmem:[#allocation8] sm:$0xff] %v637
    %646 = vst [vmem:[#allocation8 + $0x8] sm:$0xff] %v638
    %647 = vst [vmem:[#allocation8 + $0x10] sm:$0xff] %v639
    %648 = vst [vmem:[#allocation8 + $0x18] sm:$0xff] %v640
    %649 = vst [vmem:[#allocation8 + $0x20] sm:$0xff] %v641
    %650 = vst [vmem:[#allocation8 + $0x28] sm:$0xff] %v642
    %651 = vst [vmem:[#allocation8 + $0x30] sm:$0xff] %v643
    %652 = vst [vmem:[#allocation8 + $0x38] sm:$0xff] %v644
    // Predicated region
    $region42: #{tpu_custom_call.1} parent=1 // pred_check
      _
    $region43: #{tpu_custom_call.1} parent=1 // pred_check_branch
      %654 = sbr.rel (0) target = $region45
    $region44: #{tpu_custom_call.1} parent=1 // pred_region
      %s656 = ssub.s32 1024, 1024
      %657 = vsyncadd [#allocation4], %s656
      %s658 = sshll.u32 [#allocation8], 4
      %s659 = int_to_ptr.vmem [resolvable:$true] %s658
      %664 = dma.vmem_to_hbm [thread:$0]  %s659, 1024, %s7, [#allocation4], 128, 128, 8
    $region45: #{tpu_custom_call.1} parent=1 // pred_fallthru
      _
    // Predicated region
    $region46: #{tpu_custom_call.1} parent=1 // pred_check
      _
    $region47: #{tpu_custom_call.1} parent=1 // pred_check_branch
      %666 = sbr.rel (0) target = $region49
    $region48: #{tpu_custom_call.1} parent=1 // pred_region
      %667 = dma.done [#allocation4], 1024
    $region49: #{tpu_custom_call.1} parent=1 // pred_fallthru
      _
    %668 = vsyncpa [#allocation3], 1
    %669 = vsyncpa [#allocation6], 1
    %670 = vsyncpa [#allocation4], 1

</llo_original>
